<compile_context>
chip_gen: v5e
topology: v5e:2x2
jax: 0.10.0
libtpu: 0.0.40
codegen_flags: <defaults>
</compile_context>

<pallas_src>
import jax
import jax.numpy as jnp
from jax.experimental import pallas as pl
from jax.experimental.pallas import tpu as pltpu

EPS = 1e-5


def _bn_relu(h, gamma, beta, n_inv, out_dtype):
    """Training-mode BatchNorm1d (biased variance, two-pass centered stats)
    folded into a per-feature scale + shift, fused with ReLU and the bf16
    downcast for the next matmul.  h is f32 (N, H)."""
    mu = jnp.sum(h, axis=0, keepdims=True) * n_inv        # (1, H)
    d = h - mu                                             # reused for output
    var = jnp.sum(d * d, axis=0, keepdims=True) * n_inv    # biased, no cancellation
    scale = gamma * jax.lax.rsqrt(var + EPS)               # (1, H), rsqrt -> EUP
    return jnp.maximum(d * scale + beta, 0.0).astype(out_dtype)


def projector_kernel(x_ref,
                     w1_ref, g1_ref, be1_ref,
                     w2_ref, g2_ref, be2_ref,
                     w3_ref, b3_ref,
                     o_ref):
    n_inv = 1.0 / x_ref.shape[0]

    # Linear(input_dim, 4*input_dim).  Bias omitted: a per-feature constant
    # added before training-mode BN is exactly cancelled by mean subtraction.
    h = jnp.dot(x_ref[...].astype(jnp.bfloat16), w1_ref[...],
                preferred_element_type=jnp.float32)
    h = _bn_relu(h, g1_ref[...], be1_ref[...], n_inv, jnp.bfloat16)

    # Linear(4*input_dim, 4*input_dim), bias omitted for the same reason.
    h = jnp.dot(h, w2_ref[...], preferred_element_type=jnp.float32)
    h = _bn_relu(h, g2_ref[...], be2_ref[...], n_inv, jnp.bfloat16)

    # Linear(4*input_dim, output_dim) -- keeps its bias.
    out = jnp.dot(h, w3_ref[...], preferred_element_type=jnp.float32) + b3_ref[...]
    o_ref[...] = out.astype(o_ref.dtype)


def _vmem_limit_bytes():
    """Generation-aware scoped-VMEM limit (~75% of physical):
    ~96 MiB on v5e/v6e (128 MiB physical), ~48 MiB on v7x (64 MiB)."""
    try:
        cap = pltpu.get_tpu_info().vmem_capacity_bytes
    except Exception:
        cap = 64 * 1024 * 1024
    return int(cap) * 3 // 4


def projector_forward(x, params, out_dim=None):
    """x: (N, input_dim) float32.  params: dict of pre-transposed weights
    (already lane-padded at init if that was worthwhile).

    NOTE: BatchNorm needs the full batch for its reduction, so the batch axis
    is kept VMEM-resident.  Whole-batch ceiling is generation-specific (v7x
    has 64 MiB VMEM vs 128 MiB on v5e/v6e); for very large N use the
    batch-tiled grid variant noted in the header TODO.
    """
    N, _ = x.shape
    out_cols = params["w3"].shape[1]   # static (padding, if any, done at init)

    args = (x,
            params["w1"], params["g1"], params["be1"],
            params["w2"], params["g2"], params["be2"],
            params["w3"], params["b3"])

    vmem = pltpu.MemorySpace.VMEM
    out = pl.pallas_call(
        projector_kernel,
        in_specs=[pl.BlockSpec(memory_space=vmem) for _ in args],
        out_specs=pl.BlockSpec(memory_space=vmem),
        out_shape=jax.ShapeDtypeStruct((N, out_cols), x.dtype),
        compiler_params=pltpu.CompilerParams(
            vmem_limit_bytes=_vmem_limit_bytes()),
    )(*args)

    # Only slice if init actually padded (out_dim >= 128 and not a multiple).
    if out_dim is not None and out_dim != out_cols:
        out = out[:, :out_dim]
    return out


def init_params(key, input_dim, output_dim):
    """Synthetic init mimicking nn.Linear's U(-1/sqrt(in), 1/sqrt(in)).
    Weights are stored pre-transposed as (in, out) in bf16 (MXU-friendly,
    half the DMA bytes); biases / BN params stay f32.  Any lane-dense padding
    of the final Linear happens here, ONCE, never in the forward path."""
    hidden = input_dim * 4
    ks = jax.random.split(key, 6)

    def lin(kw, kb, fan_in, fan_out):
        bound = 1.0 / jnp.sqrt(fan_in)
        w = jax.random.uniform(kw, (fan_in, fan_out), jnp.float32, -bound, bound)
        b = jax.random.uniform(kb, (1, fan_out), jnp.float32, -bound, bound)
        return w.astype(jnp.bfloat16), b

    w1, b1 = lin(ks[0], ks[1], input_dim, hidden)
    w2, b2 = lin(ks[2], ks[3], hidden, hidden)
    w3, b3 = lin(ks[4], ks[5], hidden, output_dim)

    # Lane-dense output padding only pays off when output_dim >= 128; for
    # small out_dim the masked vst is cheaper than 4x the output HBM bytes.
    pad = ((-output_dim) % 128) if output_dim >= 128 else 0
    if pad:
        w3 = jnp.pad(w3, ((0, 0), (0, pad)))
        b3 = jnp.pad(b3, ((0, 0), (0, pad)))

    # BatchNorm1d: gamma=1, beta=0 (PyTorch default init).
    g1 = jnp.ones((1, hidden), jnp.float32)
    be1 = jnp.zeros((1, hidden), jnp.float32)
    g2 = jnp.ones((1, hidden), jnp.float32)
    be2 = jnp.zeros((1, hidden), jnp.float32)

    # b1/b2 kept only for the f32 reference; the kernel drops them
    # (exactly cancelled by BN's mean subtraction).
    return dict(w1=w1, b1=b1, g1=g1, be1=be1,
                w2=w2, b2=b2, g2=g2, be2=be2,
                w3=w3, b3=b3)


def reference_mirror(x, p):
    """Pure-JAX reference using the exact same numerics as the kernel
    (bf16 matmul operands, f32 accumulation, folded two-pass BN, no b1/b2)."""
    def bn_relu(h, g, be):
        mu = jnp.mean(h, axis=0, keepdims=True)
        d = h - mu
        var = jnp.mean(d * d, axis=0, keepdims=True)
        scale = g * jax.lax.rsqrt(var + EPS)
        return jnp.maximum(d * scale + be, 0.0).astype(jnp.bfloat16)

    h = jnp.dot(x.astype(jnp.bfloat16), p["w1"], preferred_element_type=jnp.float32)
    h = bn_relu(h, p["g1"], p["be1"])
    h = jnp.dot(h, p["w2"], preferred_element_type=jnp.float32)
    h = bn_relu(h, p["g2"], p["be2"])
    return jnp.dot(h, p["w3"], preferred_element_type=jnp.float32) + p["b3"]


def reference_f32(x, p):
    """Original-module semantics in f32 (includes b1/b2, training-mode BN)."""
    def bn(h, g, be):
        mu = jnp.mean(h, axis=0, keepdims=True)
        var = jnp.mean((h - mu) ** 2, axis=0, keepdims=True)
        return (h - mu) * jax.lax.rsqrt(var + EPS) * g + be

    w1 = p["w1"].astype(jnp.float32)
    w2 = p["w2"].astype(jnp.float32)
    w3 = p["w3"].astype(jnp.float32)
    h = x @ w1 + p["b1"]
    h = jnp.maximum(bn(h, p["g1"], p["be1"]), 0.0)
    h = h @ w2 + p["b2"]
    h = jnp.maximum(bn(h, p["g2"], p["be2"]), 0.0)
    return h @ w3 + p["b3"]


if __name__ == "__main__":
    # Small, shape-consistent example: latent_dim_rec = 32, batch of 8 embeddings.
    INPUT_DIM = 32     # world.config['latent_dim_rec']
    OUTPUT_DIM = 32
    N = 8

    key = jax.random.PRNGKey(0)
    kx, kp = jax.random.split(key)
    x = jax.random.normal(kx, (N, INPUT_DIM), jnp.float32)
    params = init_params(kp, INPUT_DIM, OUTPUT_DIM)

    out = jax.block_until_ready(projector_forward(x, params, out_dim=OUTPUT_DIM))
    assert out.shape == (N, OUTPUT_DIM)

    # Tight check against a reference with identical numerics (bf16 operands).
    ref_m = reference_mirror(x, params)
    assert jnp.allclose(out, ref_m, atol=2e-3, rtol=2e-3), "mismatch vs bf16-mirror reference"

    # Loose check against full-f32 module semantics (with b1/b2): the bias
    # cancellation is exact; remaining difference is bf16 rounding.
    ref_f = reference_f32(x, params)
    assert jnp.allclose(out, ref_f, atol=1e-1, rtol=1e-1), "mismatch vs f32 module reference"

    print("KERNEL_OK")
</pallas_src>

<mosaic_0001>
module attributes {stable_mosaic.version = 11 : i64} {
  func.func @projector_kernel(%arg0: memref<8x32xf32, #tpu.memory_space<vmem>>, %arg1: memref<32x128xbf16, #tpu.memory_space<vmem>>, %arg2: memref<1x128xf32, #tpu.memory_space<vmem>>, %arg3: memref<1x128xf32, #tpu.memory_space<vmem>>, %arg4: memref<128x128xbf16, #tpu.memory_space<vmem>>, %arg5: memref<1x128xf32, #tpu.memory_space<vmem>>, %arg6: memref<1x128xf32, #tpu.memory_space<vmem>>, %arg7: memref<128x32xbf16, #tpu.memory_space<vmem>>, %arg8: memref<1x32xf32, #tpu.memory_space<vmem>>, %arg9: memref<8x32xf32, #tpu.memory_space<vmem>>) attributes {dimension_semantics = [], scalar_prefetch = 0 : i64, scratch_operands = 0 : i64, tpu.core_type = #tpu.core_type<tc>} {
    %c0 = arith.constant 0 : index
    %c0_0 = arith.constant 0 : index
    %0 = vector.load %arg0[%c0, %c0_0] : memref<8x32xf32, #tpu.memory_space<vmem>>, vector<8x32xf32>
    %1 = arith.truncf %0 : vector<8x32xf32> to vector<8x32xbf16>
    %c0_1 = arith.constant 0 : index
    %c0_2 = arith.constant 0 : index
    %2 = vector.load %arg1[%c0_1, %c0_2] : memref<32x128xbf16, #tpu.memory_space<vmem>>, vector<32x128xbf16>
    %cst = arith.constant dense<0.000000e+00> : vector<8x128xf32>
    %3 = tpu.matmul %1, %2, %cst {dimension_numbers = #tpu.dot_dimension_numbers<[1], [0], [0], [1], [0, 0, 1, 1], [], []>} : vector<8x32xbf16>, vector<32x128xbf16>, vector<8x128xf32> -> vector<8x128xf32>
    %c0_3 = arith.constant 0 : index
    %c0_4 = arith.constant 0 : index
    %4 = vector.load %arg2[%c0_3, %c0_4] : memref<1x128xf32, #tpu.memory_space<vmem>>, vector<1x128xf32>
    %c0_5 = arith.constant 0 : index
    %c0_6 = arith.constant 0 : index
    %5 = vector.load %arg3[%c0_5, %c0_6] : memref<1x128xf32, #tpu.memory_space<vmem>>, vector<1x128xf32>
    %cst_7 = arith.constant dense<0.000000e+00> : vector<128xf32>
    %6 = vector.multi_reduction <add>, %3, %cst_7 [0] : vector<8x128xf32> to vector<128xf32>
    %7 = vector.shape_cast %6 : vector<128xf32> to vector<1x128xf32>
    %cst_8 = arith.constant 1.250000e-01 : f32
    %8 = vector.broadcast %cst_8 : f32 to vector<1x128xf32>
    %9 = arith.mulf %7, %8 : vector<1x128xf32>
    %10 = vector.broadcast %9 : vector<1x128xf32> to vector<8x128xf32>
    %11 = arith.subf %3, %10 : vector<8x128xf32>
    %12 = arith.mulf %11, %11 : vector<8x128xf32>
    %cst_9 = arith.constant dense<0.000000e+00> : vector<128xf32>
    %13 = vector.multi_reduction <add>, %12, %cst_9 [0] : vector<8x128xf32> to vector<128xf32>
    %14 = vector.shape_cast %13 : vector<128xf32> to vector<1x128xf32>
    %cst_10 = arith.constant 1.250000e-01 : f32
    %15 = vector.broadcast %cst_10 : f32 to vector<1x128xf32>
    %16 = arith.mulf %14, %15 : vector<1x128xf32>
    %cst_11 = arith.constant 9.99999974E-6 : f32
    %17 = vector.broadcast %cst_11 : f32 to vector<1x128xf32>
    %18 = arith.addf %16, %17 : vector<1x128xf32>
    %19 = math.rsqrt %18 : vector<1x128xf32>
    %20 = arith.mulf %4, %19 : vector<1x128xf32>
    %21 = vector.broadcast %20 : vector<1x128xf32> to vector<8x128xf32>
    %22 = arith.mulf %11, %21 : vector<8x128xf32>
    %23 = vector.broadcast %5 : vector<1x128xf32> to vector<8x128xf32>
    %24 = arith.addf %22, %23 : vector<8x128xf32>
    %cst_12 = arith.constant 0.000000e+00 : f32
    %25 = vector.broadcast %cst_12 : f32 to vector<8x128xf32>
    %26 = arith.maximumf %24, %25 : vector<8x128xf32>
    %27 = arith.truncf %26 : vector<8x128xf32> to vector<8x128xbf16>
    %c0_13 = arith.constant 0 : index
    %c0_14 = arith.constant 0 : index
    %28 = vector.load %arg4[%c0_13, %c0_14] : memref<128x128xbf16, #tpu.memory_space<vmem>>, vector<128x128xbf16>
    %cst_15 = arith.constant dense<0.000000e+00> : vector<8x128xf32>
    %29 = tpu.matmul %27, %28, %cst_15 {dimension_numbers = #tpu.dot_dimension_numbers<[1], [0], [0], [1], [0, 0, 1, 1], [], []>} : vector<8x128xbf16>, vector<128x128xbf16>, vector<8x128xf32> -> vector<8x128xf32>
    %c0_16 = arith.constant 0 : index
    %c0_17 = arith.constant 0 : index
    %30 = vector.load %arg5[%c0_16, %c0_17] : memref<1x128xf32, #tpu.memory_space<vmem>>, vector<1x128xf32>
    %c0_18 = arith.constant 0 : index
    %c0_19 = arith.constant 0 : index
    %31 = vector.load %arg6[%c0_18, %c0_19] : memref<1x128xf32, #tpu.memory_space<vmem>>, vector<1x128xf32>
    %cst_20 = arith.constant dense<0.000000e+00> : vector<128xf32>
    %32 = vector.multi_reduction <add>, %29, %cst_20 [0] : vector<8x128xf32> to vector<128xf32>
    %33 = vector.shape_cast %32 : vector<128xf32> to vector<1x128xf32>
    %cst_21 = arith.constant 1.250000e-01 : f32
    %34 = vector.broadcast %cst_21 : f32 to vector<1x128xf32>
    %35 = arith.mulf %33, %34 : vector<1x128xf32>
    %36 = vector.broadcast %35 : vector<1x128xf32> to vector<8x128xf32>
    %37 = arith.subf %29, %36 : vector<8x128xf32>
    %38 = arith.mulf %37, %37 : vector<8x128xf32>
    %cst_22 = arith.constant dense<0.000000e+00> : vector<128xf32>
    %39 = vector.multi_reduction <add>, %38, %cst_22 [0] : vector<8x128xf32> to vector<128xf32>
    %40 = vector.shape_cast %39 : vector<128xf32> to vector<1x128xf32>
    %cst_23 = arith.constant 1.250000e-01 : f32
    %41 = vector.broadcast %cst_23 : f32 to vector<1x128xf32>
    %42 = arith.mulf %40, %41 : vector<1x128xf32>
    %cst_24 = arith.constant 9.99999974E-6 : f32
    %43 = vector.broadcast %cst_24 : f32 to vector<1x128xf32>
    %44 = arith.addf %42, %43 : vector<1x128xf32>
    %45 = math.rsqrt %44 : vector<1x128xf32>
    %46 = arith.mulf %30, %45 : vector<1x128xf32>
    %47 = vector.broadcast %46 : vector<1x128xf32> to vector<8x128xf32>
    %48 = arith.mulf %37, %47 : vector<8x128xf32>
    %49 = vector.broadcast %31 : vector<1x128xf32> to vector<8x128xf32>
    %50 = arith.addf %48, %49 : vector<8x128xf32>
    %cst_25 = arith.constant 0.000000e+00 : f32
    %51 = vector.broadcast %cst_25 : f32 to vector<8x128xf32>
    %52 = arith.maximumf %50, %51 : vector<8x128xf32>
    %53 = arith.truncf %52 : vector<8x128xf32> to vector<8x128xbf16>
    %c0_26 = arith.constant 0 : index
    %c0_27 = arith.constant 0 : index
    %54 = vector.load %arg7[%c0_26, %c0_27] : memref<128x32xbf16, #tpu.memory_space<vmem>>, vector<128x32xbf16>
    %cst_28 = arith.constant dense<0.000000e+00> : vector<8x32xf32>
    %55 = tpu.matmul %53, %54, %cst_28 {dimension_numbers = #tpu.dot_dimension_numbers<[1], [0], [0], [1], [0, 0, 1, 1], [], []>} : vector<8x128xbf16>, vector<128x32xbf16>, vector<8x32xf32> -> vector<8x32xf32>
    %c0_29 = arith.constant 0 : index
    %c0_30 = arith.constant 0 : index
    %56 = vector.load %arg8[%c0_29, %c0_30] : memref<1x32xf32, #tpu.memory_space<vmem>>, vector<1x32xf32>
    %57 = vector.broadcast %56 : vector<1x32xf32> to vector<8x32xf32>
    %58 = arith.addf %55, %57 : vector<8x32xf32>
    %c0_31 = arith.constant 0 : index
    %c0_32 = arith.constant 0 : index
    %59 = vector.load %arg9[%c0_31, %c0_32] : memref<8x32xf32, #tpu.memory_space<vmem>>, vector<8x32xf32>
    tpu.vector_store %arg9[%c0_31, %c0_32], %58 {strides = array<i32>} : memref<8x32xf32, #tpu.memory_space<vmem>>, vector<8x32xf32>,
    return
  }
}

</mosaic_0001>

<llo_original>
// kernel: tpu_custom_call.1
$region0: #{tpu_custom_call.1}
  #allocation0 [shape = 'u32[]', space=smem, size = 0x4, offset = 0x4, fixed_abs, tag = 'smem constant byte address 0x4 - core index']
  #allocation1 [shape = 'u32[72,128]{1,0:T(1,128)}', space=vmem, size = 0x9000, scoped, tag = 'internal scratch']
  %s0 = inlined_call_operand.hbm [shape: f32[8,32], index: 0, kind: input, shape index: {}]
  %s1 = inlined_call_operand.vmem [shape: bf16[32,128], index: 1, kind: input, shape index: {}]
  %s2 = inlined_call_operand.vmem [shape: f32[1,128], index: 2, kind: input, shape index: {}]
  %s3 = inlined_call_operand.vmem [shape: f32[1,128], index: 3, kind: input, shape index: {}]
  %s4 = inlined_call_operand.vmem [shape: bf16[128,128], index: 4, kind: input, shape index: {}]
  %s5 = inlined_call_operand.vmem [shape: f32[1,128], index: 5, kind: input, shape index: {}]
  %s6 = inlined_call_operand.vmem [shape: f32[1,128], index: 6, kind: input, shape index: {}]
  %s7 = inlined_call_operand.vmem [shape: bf16[128,32], index: 7, kind: input, shape index: {}]
  %s8 = inlined_call_operand.vmem [shape: f32[1,32], index: 8, kind: input, shape index: {}]
  %s9 = inlined_call_operand.hbm [shape: f32[8,32], index: 9, kind: output, shape index: {}]
  %s10 = sld [smem:[#allocation0]]
  $region50: #{tpu_custom_call.1} parent=0
    _
  %s12 = ssub.s32 1, %s10
  %s13 = scalar_select 0, %s12, %s10
  $region1: #{tpu_custom_call.1} parent=0
    #allocation2 [shape = 'u8[4096]{0}', space=vmem, size = 0x1000, scoped, tag = 'input window, operand 0, single buffered']
    #allocation3 [shape = 's32[1]{0}', space=sflag, size = 0x4, scoped, tag = 'scoped memory for tpu_custom_call.1']
    #allocation4 [shape = 's32[1]{0}', space=sflag, size = 0x4, scoped, tag = 'scoped memory for tpu_custom_call.1']
    #allocation5 [shape = 'u8[4096]{0}', space=vmem, size = 0x1000, scoped, tag = 'output window, operand 0, single buffered']
    %14 = vsyncpa [#allocation3], 0
    %15 = vsyncpa [#allocation4], 0
    // Predicated region
    $region2: #{tpu_custom_call.1} parent=1 // pred_check
      _
    $region3: #{tpu_custom_call.1} parent=1 // pred_check_branch
      %17 = sbr.rel (0) target = $region5
    $region4: #{tpu_custom_call.1} parent=1 // pred_region
      %19 = vsyncadd [#allocation3], 0
      %s21 = sshll.u32 %s0, 4
      %s22 = int_to_ptr.hbm [resolvable:$true] %s21
      %s23 = sshll.u32 [#allocation2], 4
      %s24 = int_to_ptr.vmem [resolvable:$true] %s23
      %26 = dma.hbm_to_vmem [thread:$0]  %s22, 128, %s24, [#allocation3]
    $region5: #{tpu_custom_call.1} parent=1 // pred_fallthru
      _
    // Predicated region
    $region6: #{tpu_custom_call.1} parent=1 // pred_check
      _
    $region7: #{tpu_custom_call.1} parent=1 // pred_check_branch
      %28 = sbr.rel (0) target = $region9
    $region8: #{tpu_custom_call.1} parent=1 // pred_region
      _
    $region9: #{tpu_custom_call.1} parent=1 // pred_fallthru
      _
    // Predicated region
    $region10: #{tpu_custom_call.1} parent=1 // pred_check
      _
    $region11: #{tpu_custom_call.1} parent=1 // pred_check_branch
      %30 = sbr.rel (0) target = $region13
    $region12: #{tpu_custom_call.1} parent=1 // pred_region
      _
    $region13: #{tpu_custom_call.1} parent=1 // pred_fallthru
      _
    // Predicated region
    $region14: #{tpu_custom_call.1} parent=1 // pred_check
      _
    $region15: #{tpu_custom_call.1} parent=1 // pred_check_branch
      %32 = sbr.rel (0) target = $region17
    $region16: #{tpu_custom_call.1} parent=1 // pred_region
      _
    $region17: #{tpu_custom_call.1} parent=1 // pred_fallthru
      _
    // Predicated region
    $region18: #{tpu_custom_call.1} parent=1 // pred_check
      _
    $region19: #{tpu_custom_call.1} parent=1 // pred_check_branch
      %34 = sbr.rel (0) target = $region21
    $region20: #{tpu_custom_call.1} parent=1 // pred_region
      _
    $region21: #{tpu_custom_call.1} parent=1 // pred_fallthru
      _
    // Predicated region
    $region22: #{tpu_custom_call.1} parent=1 // pred_check
      _
    $region23: #{tpu_custom_call.1} parent=1 // pred_check_branch
      %36 = sbr.rel (0) target = $region25
    $region24: #{tpu_custom_call.1} parent=1 // pred_region
      _
    $region25: #{tpu_custom_call.1} parent=1 // pred_fallthru
      _
    // Predicated region
    $region26: #{tpu_custom_call.1} parent=1 // pred_check
      _
    $region27: #{tpu_custom_call.1} parent=1 // pred_check_branch
      %38 = sbr.rel (0) target = $region29
    $region28: #{tpu_custom_call.1} parent=1 // pred_region
      _
    $region29: #{tpu_custom_call.1} parent=1 // pred_fallthru
      _
    // Predicated region
    $region30: #{tpu_custom_call.1} parent=1 // pred_check
      _
    $region31: #{tpu_custom_call.1} parent=1 // pred_check_branch
      %40 = sbr.rel (0) target = $region33
    $region32: #{tpu_custom_call.1} parent=1 // pred_region
      _
    $region33: #{tpu_custom_call.1} parent=1 // pred_fallthru
      _
    // Predicated region
    $region34: #{tpu_custom_call.1} parent=1 // pred_check
      _
    $region35: #{tpu_custom_call.1} parent=1 // pred_check_branch
      %42 = sbr.rel (0) target = $region37
    $region36: #{tpu_custom_call.1} parent=1 // pred_region
      _
    $region37: #{tpu_custom_call.1} parent=1 // pred_fallthru
      _
    // Predicated region
    $region38: #{tpu_custom_call.1} parent=1 // pred_check
      _
    $region39: #{tpu_custom_call.1} parent=1 // pred_check_branch
      %44 = sbr.rel (0) target = $region41
    $region40: #{tpu_custom_call.1} parent=1 // pred_region
      %46 = dma.done [#allocation3], 128
    $region41: #{tpu_custom_call.1} parent=1 // pred_fallthru
      _
    %v48 = vld [vmem:[#allocation2] sm:$0xff]
    %v49 = vpack.c.bf16 %v48, %v48
    %v50 = vld [vmem:[%s1] sm:$0xf]
    %v51 = vld [vmem:[%s1 + $0x4] sm:$0xf]
    %v52 = vld [vmem:[%s1 + $0x8] sm:$0xf]
    %v53 = vld [vmem:[%s1 + $0xc] sm:$0xf]
    %v58 = vunpack.c.l.b16 %v50
    %v59 = vunpack.c.l.b16 %v51
    %v60 = vunpack.c.l.b16 %v52
    %v61 = vunpack.c.l.b16 %v53
    %v62 = vpack.c.b16 %v59, %v58
    %v63 = vpack.c.b16 %v61, %v60
    %vm66 = vcmask 261120
    %v68 = vsel %vm66, %v49, 0
    %70 = vmatpush.bf16.msra.mxu0 0
    %71 = vmatpush.bf16.msra.mxu0 0
    %72 = vmatpush.bf16.msra.mxu0 0
    %73 = vmatpush.bf16.msra.mxu0 0
    %74 = vmatpush.bf16.msra.mxu0 0
    %75 = vmatpush.bf16.msra.mxu0 0
    %76 = vmatpush.bf16.msra.mxu0 %v63
    %77 = vmatpush.bf16.msra.mxu0 %v62
    %78 = vmatmul.bf16.gmra.mxu0 %v68
    %v79 = vpop.f32.mrf.mxu0
    %v80 = vadd.f32 0.0, %v79
    %v81 = vpop.f32.mrf.mxu0
    %82 = vdwg.mxu0
    %v83 = vld [vmem:[%s2] sm:$0x1]
    %v84 = vld [vmem:[%s3] sm:$0x1]
    %v85 = vrot.slane %v80, 4
    %v86 = vadd.f32 %v80, %v85
    %v87 = vrot.slane %v86, 2
    %v88 = vadd.f32 %v86, %v87
    %v89 = vrot.slane %v88, 1
    %v90 = vadd.f32 %v88, %v89
    %v91 = vmul.f32 %v90, 0.125
    %v92 = vsub.f32 %v80, %v91
    %v93 = vmul.f32 %v92, %v92
    %v94 = vrot.slane %v93, 4
    %v95 = vadd.f32 %v93, %v94
    %v96 = vrot.slane %v95, 2
    %v97 = vadd.f32 %v95, %v96
    %v98 = vrot.slane %v97, 1
    %v99 = vadd.f32 %v97, %v98
    %v100 = vmul.f32 %v99, 0.125
    %v101 = vadd.f32 %v100, 1e-05
    %v102 = vrsqrt.pop %v101
    %v103 = vmul.f32 %v102, %v101
    %v104 = vmul.f32 %v103, %v102
    %v105 = vmul.f32 0.5, %v104
    %v106 = vsub.f32 1.5, %v105
    %v107 = vmul.f32 %v102, %v106
    %vm108 = vweird.f32 %v101
    %vm109 = vweird.f32 %v102
    %vm110 = vmor %vm108, %vm109
    %v111 = vsel %vm110, %v102, %v107
    %v112 = vmul.f32 %v83, %v111
    %v114 = vperm.slane %v112, 0
    %v116 = vmul.f32 %v92, %v114
    %v118 = vperm.slane %v84, 0
    %v120 = vadd.f32 %v116, %v118
    %v121 = vmax.f32 %v120, 0.0
    %v122 = vpack.c.bf16 %v121, %v121
    %v123 = vld [vmem:[%s4] sm:$0xf]
    %v124 = vld [vmem:[%s4 + $0x4] sm:$0xf]
    %v125 = vld [vmem:[%s4 + $0x8] sm:$0xf]
    %v126 = vld [vmem:[%s4 + $0xc] sm:$0xf]
    %v127 = vld [vmem:[%s4 + $0x10] sm:$0xf]
    %v128 = vld [vmem:[%s4 + $0x14] sm:$0xf]
    %v129 = vld [vmem:[%s4 + $0x18] sm:$0xf]
    %v130 = vld [vmem:[%s4 + $0x1c] sm:$0xf]
    %v131 = vld [vmem:[%s4 + $0x20] sm:$0xf]
    %v132 = vld [vmem:[%s4 + $0x24] sm:$0xf]
    %v133 = vld [vmem:[%s4 + $0x28] sm:$0xf]
    %v134 = vld [vmem:[%s4 + $0x2c] sm:$0xf]
    %v135 = vld [vmem:[%s4 + $0x30] sm:$0xf]
    %v136 = vld [vmem:[%s4 + $0x34] sm:$0xf]
    %v137 = vld [vmem:[%s4 + $0x38] sm:$0xf]
    %v138 = vld [vmem:[%s4 + $0x3c] sm:$0xf]
    %v155 = vunpack.c.l.b16 %v123
    %v156 = vunpack.c.l.b16 %v124
    %v157 = vunpack.c.l.b16 %v125
    %v158 = vunpack.c.l.b16 %v126
    %v159 = vunpack.c.l.b16 %v127
    %v160 = vunpack.c.l.b16 %v128
    %v161 = vunpack.c.l.b16 %v129
    %v162 = vunpack.c.l.b16 %v130
    %v163 = vunpack.c.l.b16 %v131
    %v164 = vunpack.c.l.b16 %v132
    %v165 = vunpack.c.l.b16 %v133
    %v166 = vunpack.c.l.b16 %v134
    %v167 = vunpack.c.l.b16 %v135
    %v168 = vunpack.c.l.b16 %v136
    %v169 = vunpack.c.l.b16 %v137
    %v170 = vunpack.c.l.b16 %v138
    %v171 = vpack.c.b16 %v156, %v155
    %v172 = vpack.c.b16 %v158, %v157
    %v173 = vpack.c.b16 %v160, %v159
    %v174 = vpack.c.b16 %v162, %v161
    %v175 = vpack.c.b16 %v164, %v163
    %v176 = vpack.c.b16 %v166, %v165
    %v177 = vpack.c.b16 %v168, %v167
    %v178 = vpack.c.b16 %v170, %v169
    %187 = vmatpush.bf16.msra.mxu0 %v178
    %188 = vmatpush.bf16.msra.mxu0 %v177
    %189 = vmatpush.bf16.msra.mxu0 %v176
    %190 = vmatpush.bf16.msra.mxu0 %v175
    %191 = vmatpush.bf16.msra.mxu0 %v174
    %192 = vmatpush.bf16.msra.mxu0 %v173
    %193 = vmatpush.bf16.msra.mxu0 %v172
    %194 = vmatpush.bf16.msra.mxu0 %v171
    %195 = vmatmul.bf16.gmra.mxu0 %v122
    %v196 = vpop.f32.mrf.mxu0
    %v197 = vadd.f32 0.0, %v196
    %v198 = vpop.f32.mrf.mxu0
    %199 = vdwg.mxu0
    %v200 = vld [vmem:[%s5] sm:$0x1]
    %v201 = vld [vmem:[%s6] sm:$0x1]
    %v202 = vrot.slane %v197, 4
    %v203 = vadd.f32 %v197, %v202
    %v204 = vrot.slane %v203, 2
    %v205 = vadd.f32 %v203, %v204
    %v206 = vrot.slane %v205, 1
    %v207 = vadd.f32 %v205, %v206
    %v208 = vmul.f32 %v207, 0.125
    %v209 = vsub.f32 %v197, %v208
    %v210 = vmul.f32 %v209, %v209
    %v211 = vrot.slane %v210, 4
    %v212 = vadd.f32 %v210, %v211
    %v213 = vrot.slane %v212, 2
    %v214 = vadd.f32 %v212, %v213
    %v215 = vrot.slane %v214, 1
    %v216 = vadd.f32 %v214, %v215
    %v217 = vmul.f32 %v216, 0.125
    %v218 = vadd.f32 %v217, 1e-05
    %v219 = vrsqrt.pop %v218
    %v220 = vmul.f32 %v219, %v218
    %v221 = vmul.f32 %v220, %v219
    %v222 = vmul.f32 0.5, %v221
    %v223 = vsub.f32 1.5, %v222
    %v224 = vmul.f32 %v219, %v223
    %vm225 = vweird.f32 %v218
    %vm226 = vweird.f32 %v219
    %vm227 = vmor %vm225, %vm226
    %v228 = vsel %vm227, %v219, %v224
    %v229 = vmul.f32 %v200, %v228
    %v231 = vperm.slane %v229, 0
    %v233 = vmul.f32 %v209, %v231
    %v235 = vperm.slane %v201, 0
    %v237 = vadd.f32 %v233, %v235
    %v238 = vmax.f32 %v237, 0.0
    %v239 = vpack.c.bf16 %v238, %v238
    %v240 = vld [vmem:[%s7] sm:$0xf]
    %v241 = vld [vmem:[%s7 + $0x4] sm:$0xf]
    %v242 = vld [vmem:[%s7 + $0x8] sm:$0xf]
    %v243 = vld [vmem:[%s7 + $0xc] sm:$0xf]
    %v244 = vld [vmem:[%s7 + $0x10] sm:$0xf]
    %v245 = vld [vmem:[%s7 + $0x14] sm:$0xf]
    %v246 = vld [vmem:[%s7 + $0x18] sm:$0xf]
    %v247 = vld [vmem:[%s7 + $0x1c] sm:$0xf]
    %v248 = vld [vmem:[%s7 + $0x20] sm:$0xf]
    %v249 = vld [vmem:[%s7 + $0x24] sm:$0xf]
    %v250 = vld [vmem:[%s7 + $0x28] sm:$0xf]
    %v251 = vld [vmem:[%s7 + $0x2c] sm:$0xf]
    %v252 = vld [vmem:[%s7 + $0x30] sm:$0xf]
    %v253 = vld [vmem:[%s7 + $0x34] sm:$0xf]
    %v254 = vld [vmem:[%s7 + $0x38] sm:$0xf]
    %v255 = vld [vmem:[%s7 + $0x3c] sm:$0xf]
    %v256 = vld [vmem:[%s8] sm:$0x1]
    %v258 = vperm.slane %v256, 0
    %v276 = vunpack.c.l.b16 %v240
    %v277 = vunpack.c.l.b16 %v241
    %v278 = vunpack.c.l.b16 %v242
    %v279 = vunpack.c.l.b16 %v243
    %v280 = vunpack.c.l.b16 %v244
    %v281 = vunpack.c.l.b16 %v245
    %v282 = vunpack.c.l.b16 %v246
    %v283 = vunpack.c.l.b16 %v247
    %v284 = vunpack.c.l.b16 %v248
    %v285 = vunpack.c.l.b16 %v249
    %v286 = vunpack.c.l.b16 %v250
    %v287 = vunpack.c.l.b16 %v251
    %v288 = vunpack.c.l.b16 %v252
    %v289 = vunpack.c.l.b16 %v253
    %v290 = vunpack.c.l.b16 %v254
    %v291 = vunpack.c.l.b16 %v255
    %v292 = vpack.c.b16 %v277, %v276
    %v293 = vpack.c.b16 %v279, %v278
    %v294 = vpack.c.b16 %v281, %v280
    %v295 = vpack.c.b16 %v283, %v282
    %v296 = vpack.c.b16 %v285, %v284
    %v297 = vpack.c.b16 %v287, %v286
    %v298 = vpack.c.b16 %v289, %v288
    %v299 = vpack.c.b16 %v291, %v290
    %308 = vmatpush.bf16.msra.mxu0 %v299
    %309 = vmatpush.bf16.msra.mxu0 %v298
    %310 = vmatpush.bf16.msra.mxu0 %v297
    %311 = vmatpush.bf16.msra.mxu0 %v296
    %312 = vmatpush.bf16.msra.mxu0 %v295
    %313 = vmatpush.bf16.msra.mxu0 %v294
    %314 = vmatpush.bf16.msra.mxu0 %v293
    %315 = vmatpush.bf16.msra.mxu0 %v292
    %316 = vmatmul.bf16.gmra.mxu0 %v239
    %v317 = vpop.f32.mrf.mxu0
    %v318 = vadd.f32 %v258, %v317
    %v319 = vpop.f32.mrf.mxu0
    %320 = vdwg.mxu0
    %321 = vst.msk [vmem:[#allocation5] sm:$0xff] %vm66, %v318
    // Predicated region
    $region42: #{tpu_custom_call.1} parent=1 // pred_check
      _
    $region43: #{tpu_custom_call.1} parent=1 // pred_check_branch
      %323 = sbr.rel (0) target = $region45
    $region44: #{tpu_custom_call.1} parent=1 // pred_region
      %325 = vsyncadd [#allocation4], 0
      %s327 = sshll.u32 [#allocation5], 4
      %s328 = int_to_ptr.vmem [resolvable:$true] %s327
      %s329 = sshll.u32 %s9, 4
      %s330 = int_to_ptr.hbm [resolvable:$true] %s329
      %332 = dma.vmem_to_hbm [thread:$0]  %s328, 128, %s330, [#allocation4]
    $region45: #{tpu_custom_call.1} parent=1 // pred_fallthru
      _
    // Predicated region
    $region46: #{tpu_custom_call.1} parent=1 // pred_check
      _
    $region47: #{tpu_custom_call.1} parent=1 // pred_check_branch
      %334 = sbr.rel (0) target = $region49
    $region48: #{tpu_custom_call.1} parent=1 // pred_region
      %336 = dma.done [#allocation4], 128
    $region49: #{tpu_custom_call.1} parent=1 // pred_fallthru
      _
    %337 = vsyncpa [#allocation3], 1
    %338 = vsyncpa [#allocation4], 1

</llo_original>
